<compile_context>
chip_gen: v7x
topology: tpu7x:2x2x1
jax: 0.10.0
libtpu: 0.0.40
codegen_flags: <defaults>
</compile_context>

<pallas_src>
import functools

import jax
import jax.numpy as jnp
from jax.experimental import pallas as pl
from jax.experimental.pallas import tpu as pltpu

_LANE = 128


def _align_up(x, a):
    return ((x + a - 1) // a) * a


def _gcn_kernel(kt_ref, nnz_ref, adj_ref, fw_ref, b_ref, o_ref, *,
                tk, nkt, fw_resident):
    # grid = (row tiles of N [parallel], compacted non-empty k tiles [arbitrary])
    i = pl.program_id(0)
    k = pl.program_id(1)

    # First visit of this output row-tile: seed with the broadcast bias so no
    # separate epilogue read-modify-write over the output block is needed.
    @pl.when(k == 0)
    def _():
        o_ref[...] = jnp.broadcast_to(b_ref[...], o_ref.shape)

    # Block-sparse skip: only the first nnz[i] entries of the compacted k-tile
    # list are real; the adj index_map clamps past that (no new DMA) and we
    # skip the MXU work here.
    @pl.when(k < nnz_ref[i])
    def _():
        if fw_resident:
            kb = kt_ref[i * nkt + k]
            start = pl.multiple_of(kb * tk, tk)
            fw_tile = fw_ref[pl.ds(start, tk), :]
        else:
            fw_tile = fw_ref[...]
        o_ref[...] += jnp.dot(adj_ref[...], fw_tile,
                              preferred_element_type=jnp.float32)


def sparse_gcn_conv(adj, features, weight, bias, *, tm=1024, tk=None,
                    use_bf16=True, fw_resident_bytes=8 * 1024 * 1024):
    """Fused (adj @ features) @ weight + bias == adj @ (features @ weight) + bias."""
    N, N2 = adj.shape
    assert N == N2, "adjacency must be square"
    F_in = features.shape[1]
    F_out = weight.shape[1]

    stream_dtype = jnp.bfloat16 if use_bf16 else jnp.float32
    itemsize = jnp.dtype(stream_dtype).itemsize
    row_align = 16 if use_bf16 else 8          # bf16 packs 2 rows per sublane

    if tk is None:
        tk = 4096 if use_bf16 else 2048        # ~8 MiB adj tile on the fast path

    # ---- tile selection -----------------------------------------------------
    tm = min(tm, _align_up(N, row_align))
    tm = max(row_align, _align_up(tm, row_align))
    # Megacore: keep >= 2 row tiles when the graph allows it (v7x has 2 TCs).
    if -(-N // tm) < 2 and N >= 2 * row_align:
        tm = _align_up(-(-N // 2), row_align)
    tk = min(tk, _align_up(N, _LANE))
    tk = max(_LANE, _align_up(tk, _LANE))

    F_out_pad = max(_LANE, _align_up(F_out, _LANE))   # lane-dense output/fw

    # ---- VMEM budget, capped inside physical VMEM of the current chip -------
    try:
        phys_vmem = pltpu.get_tpu_info().vmem_capacity_bytes
    except Exception:  # interpret mode / query unavailable: assume v7x-sized VMEM
        phys_vmem = 64 * 1024 * 1024
    vmem_cap = int(phys_vmem * 3 // 4)   # ~48 MiB on v7x, ~96 MiB on v5e/v6e

    def _estimate(tm_, tk_):
        k_pad = _align_up(N, tk_)
        fw_res = k_pad * F_out_pad * itemsize <= fw_resident_bytes
        fw_rows = k_pad if fw_res else tk_
        # Pallas double-buffers every input, even constant-index ("resident") ones.
        byt = (2 * tm_ * tk_ * itemsize            # adj stream (double buffer)
               + 2 * fw_rows * F_out_pad * itemsize  # fw
               + 2 * F_out_pad * 4                   # bias
               + 2 * tm_ * F_out_pad * 4)            # output block
        return byt, fw_res

    while True:
        vmem_bytes, fw_resident = _estimate(tm, tk)
        if int(vmem_bytes * 1.3) <= vmem_cap or (tk <= _LANE and tm <= row_align):
            break
        if tk > _LANE:
            tk = max(_LANE, (tk // 2 // _LANE) * _LANE)
        else:
            tm = max(row_align, (tm // 2 // row_align) * row_align)

    nm = -(-N // tm)
    nkt = -(-N // tk)
    M_pad = nm * tm
    K_pad = nkt * tk

    # ---- pad operands to the tile grid --------------------------------------
    adj_f32 = adj.astype(jnp.float32)
    if (M_pad, K_pad) != (N, N):
        adj_p = jnp.zeros((M_pad, K_pad), jnp.float32).at[:N, :N].set(adj_f32)
    else:
        adj_p = adj_f32

    # Block-sparsity map: per row tile, compacted list of non-empty k tiles.
    block_nz = jnp.any(adj_p.reshape(nm, tm, nkt, tk) != 0.0, axis=(1, 3))
    nnz = jnp.sum(block_nz, axis=1).astype(jnp.int32)                     # (nm,)
    kt_flat = jnp.argsort(~block_nz, axis=1, stable=True).astype(jnp.int32).reshape(-1)
    try:
        max_nnz = max(int(jnp.max(nnz)), 1)       # shrink the k grid to the densest row tile
    except Exception:                              # adj abstract (e.g. under jit): full k grid
        max_nnz = nkt

    # Hoisted small matmul: fw = features @ weight (padded, f32, plain XLA).
    w_pad = jnp.zeros((F_in, F_out_pad), jnp.float32).at[:, :F_out].set(
        weight.astype(jnp.float32))
    fw = features.astype(jnp.float32) @ w_pad                             # (N, F_out_pad)
    if K_pad != N:
        fw = jnp.zeros((K_pad, F_out_pad), jnp.float32).at[:N, :].set(fw)
    fw_in = fw.astype(stream_dtype)
    adj_in = adj_p.astype(stream_dtype)
    b_pad = jnp.zeros((1, F_out_pad), jnp.float32).at[:, :F_out].set(
        bias.reshape(1, F_out).astype(jnp.float32))

    # ---- specs ---------------------------------------------------------------
    def adj_index_map(i, k, kt_ref, nnz_ref):
        # Clamp so steps past nnz[i] re-use the previous block (no extra DMA).
        k_eff = jnp.minimum(k, jnp.maximum(nnz_ref[i] - 1, 0))
        return (i, kt_ref[i * nkt + k_eff])

    if fw_resident:
        fw_spec = pl.BlockSpec((K_pad, F_out_pad), lambda i, k, kt_ref, nnz_ref: (0, 0))
    else:
        def fw_index_map(i, k, kt_ref, nnz_ref):
            k_eff = jnp.minimum(k, jnp.maximum(nnz_ref[i] - 1, 0))
            return (kt_ref[i * nkt + k_eff], 0)
        fw_spec = pl.BlockSpec((tk, F_out_pad), fw_index_map)

    kernel = functools.partial(_gcn_kernel, tk=tk, nkt=nkt, fw_resident=fw_resident)

    vmem_limit = max(min(int(vmem_bytes * 1.3) + (2 << 20), vmem_cap),
                     4 * 1024 * 1024)

    out_pad = pl.pallas_call(
        kernel,
        out_shape=jax.ShapeDtypeStruct((M_pad, F_out_pad), jnp.float32),
        grid_spec=pltpu.PrefetchScalarGridSpec(
            num_scalar_prefetch=2,
            grid=(nm, max_nnz),
            in_specs=[
                pl.BlockSpec((tm, tk), adj_index_map),                         # adj (streamed)
                fw_spec,                                                        # fw
                pl.BlockSpec((1, F_out_pad), lambda i, k, kt_ref, nnz_ref: (0, 0)),  # bias
            ],
            out_specs=pl.BlockSpec((tm, F_out_pad),
                                   lambda i, k, kt_ref, nnz_ref: (i, 0)),
        ),
        compiler_params=pltpu.CompilerParams(
            dimension_semantics=("parallel", "arbitrary"),
            vmem_limit_bytes=vmem_limit,
        ),
    )(kt_flat, nnz, adj_in, fw_in, b_pad)

    # Strip the row / lane padding.
    return out_pad[:N, :F_out]


if __name__ == "__main__":
    # Small, deterministic example shapes (matches the out_feats == 16 branch).
    N = 256          # number of graph nodes
    F_in = 32        # in_feats
    F_out = 16       # out_feats

    key = jax.random.PRNGKey(0)
    k_adj, k_mask, k_feat, k_w, k_b = jax.random.split(key, 5)

    # Sparse-ish adjacency represented densely (~10% nonzeros).
    adj_vals = jax.random.normal(k_adj, (N, N), dtype=jnp.float32)
    adj_mask = (jax.random.uniform(k_mask, (N, N)) < 0.1).astype(jnp.float32)
    adj = adj_vals * adj_mask

    features = jax.random.normal(k_feat, (N, F_in), dtype=jnp.float32)

    # Deterministic parameter init mimicking torch.randn shapes in __init__.
    weight = jax.random.normal(k_w, (F_in, F_out), dtype=jnp.float32)
    bias = jax.random.normal(k_b, (F_out,), dtype=jnp.float32)

    # Reference (pure JAX, same math/order as the PyTorch module).
    ref = (adj @ features) @ weight + bias

    # f32 streaming path: tight check (only re-association rounding differs).
    out_f32 = jax.block_until_ready(
        sparse_gcn_conv(adj, features, weight, bias, use_bf16=False))
    assert out_f32.shape == (N, F_out)
    assert jnp.allclose(out_f32, ref, atol=1e-2, rtol=1e-3), "f32 mismatch vs reference"

    # Default fast path: bf16 adj/fw stream, f32 accumulation — looser check.
    out_bf16 = jax.block_until_ready(
        sparse_gcn_conv(adj, features, weight, bias, use_bf16=True))
    assert out_bf16.shape == (N, F_out)
    assert jnp.allclose(out_bf16, ref, atol=0.5, rtol=5e-2), "bf16 mismatch vs reference"

    print("KERNEL_OK")
</pallas_src>

<mosaic_0001>
module attributes {stable_mosaic.version = 11 : i64} {
  func.func @_gcn_kernel(%arg0: i32, %arg1: i32, %arg2: memref<2xi32, #tpu.memory_space<smem>>, %arg3: memref<2xi32, #tpu.memory_space<smem>>, %arg4: memref<128x256xf32, #tpu.memory_space<vmem>>, %arg5: memref<256x128xf32, #tpu.memory_space<vmem>>, %arg6: memref<1x128xf32, #tpu.memory_space<vmem>>, %arg7: memref<128x128xf32, #tpu.memory_space<vmem>>) attributes {dimension_semantics = [#tpu.dimension_semantics<parallel>, #tpu.dimension_semantics<arbitrary>], iteration_bounds = array<i64: 2, 1>, scalar_prefetch = 2 : i64, scratch_operands = 0 : i64, tpu.core_type = #tpu.core_type<tc>, window_params = [{transform_indices = @transform_0, window_bounds = array<i64: 128, 256>}, {pipeline_mode = #tpu.pipeline_mode<synchronous>, transform_indices = @transform_1, window_bounds = array<i64: 256, 128>}, {pipeline_mode = #tpu.pipeline_mode<synchronous>, transform_indices = @transform_2, window_bounds = array<i64: 1, 128>}, {transform_indices = @transform_3, window_bounds = array<i64: 128, 128>}]} {
    %c0_i32 = arith.constant 0 : i32
    %0 = arith.cmpi eq, %arg1, %c0_i32 : i32
    %1 = arith.extui %0 : i1 to i32
    %c0_i32_0 = arith.constant 0 : i32
    %2 = arith.cmpi ne, %1, %c0_i32_0 : i32
    scf.if %2 {
      %c0 = arith.constant 0 : index
      %c0_2 = arith.constant 0 : index
      %8 = vector.load %arg6[%c0, %c0_2] : memref<1x128xf32, #tpu.memory_space<vmem>>, vector<1x128xf32>
      %9 = vector.shape_cast %8 : vector<1x128xf32> to vector<1x128xf32>
      %10 = vector.broadcast %9 : vector<1x128xf32> to vector<128x128xf32>
      %c0_3 = arith.constant 0 : index
      %c0_4 = arith.constant 0 : index
      %11 = vector.load %arg7[%c0_3, %c0_4] : memref<128x128xf32, #tpu.memory_space<vmem>>, vector<128x128xf32>
      tpu.vector_store %arg7[%c0_3, %c0_4], %10 {strides = array<i32>} : memref<128x128xf32, #tpu.memory_space<vmem>>, vector<128x128xf32>,
    } else {
    }
    %3 = arith.index_cast %arg0 : i32 to index
    %4 = memref.load %arg3[%3] : memref<2xi32, #tpu.memory_space<smem>>
    %5 = arith.cmpi slt, %arg1, %4 : i32
    %6 = arith.extui %5 : i1 to i32
    %c0_i32_1 = arith.constant 0 : i32
    %7 = arith.cmpi ne, %6, %c0_i32_1 : i32
    scf.if %7 {
      %c1_i32 = arith.constant 1 : i32
      %8 = arith.muli %arg0, %c1_i32 : i32
      %9 = arith.addi %8, %arg1 : i32
      %10 = arith.index_cast %9 : i32 to index
      %11 = memref.load %arg2[%10] : memref<2xi32, #tpu.memory_space<smem>>
      %c256_i32 = arith.constant 256 : i32
      %12 = arith.muli %11, %c256_i32 : i32
      %13 = tpu.assume_multiple %12, 256 : i32
      %14 = arith.index_cast %13 : i32 to index
      %c0 = arith.constant 0 : index
      %15 = vector.load %arg5[%14, %c0] : memref<256x128xf32, #tpu.memory_space<vmem>>, vector<256x128xf32>
      %c0_2 = arith.constant 0 : index
      %c0_3 = arith.constant 0 : index
      %16 = vector.load %arg7[%c0_2, %c0_3] : memref<128x128xf32, #tpu.memory_space<vmem>>, vector<128x128xf32>
      %c0_4 = arith.constant 0 : index
      %c0_5 = arith.constant 0 : index
      %17 = vector.load %arg4[%c0_4, %c0_5] : memref<128x256xf32, #tpu.memory_space<vmem>>, vector<128x256xf32>
      %cst = arith.constant dense<0.000000e+00> : vector<128x128xf32>
      %18 = tpu.matmul %17, %15, %cst {dimension_numbers = #tpu.dot_dimension_numbers<[1], [0], [0], [1], [0, 0, 1, 1], [], []>} : vector<128x256xf32>, vector<256x128xf32>, vector<128x128xf32> -> vector<128x128xf32>
      %19 = arith.addf %16, %18 : vector<128x128xf32>
      %c0_6 = arith.constant 0 : index
      %c0_7 = arith.constant 0 : index
      %20 = vector.load %arg7[%c0_6, %c0_7] : memref<128x128xf32, #tpu.memory_space<vmem>>, vector<128x128xf32>
      tpu.vector_store %arg7[%c0_6, %c0_7], %19 {strides = array<i32>} : memref<128x128xf32, #tpu.memory_space<vmem>>, vector<128x128xf32>,
    } else {
    }
    return
  }
  func.func @transform_0(%arg0: i32, %arg1: i32, %arg2: memref<2xi32, #tpu.memory_space<smem>>, %arg3: memref<2xi32, #tpu.memory_space<smem>>) -> (i32, i32) {
    %0 = arith.index_cast %arg0 : i32 to index
    %1 = memref.load %arg3[%0] : memref<2xi32, #tpu.memory_space<smem>>
    %c1_i32 = arith.constant 1 : i32
    %2 = arith.subi %1, %c1_i32 : i32
    %c0_i32 = arith.constant 0 : i32
    %3 = arith.maxsi %2, %c0_i32 : i32
    %4 = arith.minsi %arg1, %3 : i32
    %c1_i32_0 = arith.constant 1 : i32
    %5 = arith.muli %arg0, %c1_i32_0 : i32
    %6 = arith.addi %5, %4 : i32
    %7 = arith.index_cast %6 : i32 to index
    %8 = memref.load %arg2[%7] : memref<2xi32, #tpu.memory_space<smem>>
    %c0_i32_1 = arith.constant 0 : i32
    return %arg0, %8 : i32, i32
  }
  func.func @transform_1(%arg0: i32, %arg1: i32, %arg2: memref<2xi32, #tpu.memory_space<smem>>, %arg3: memref<2xi32, #tpu.memory_space<smem>>) -> (i32, i32) {
    %c0_i32 = arith.constant 0 : i32
    %c0_i32_0 = arith.constant 0 : i32
    %c0_i32_1 = arith.constant 0 : i32
    return %c0_i32, %c0_i32_0 : i32, i32
  }
  func.func @transform_2(%arg0: i32, %arg1: i32, %arg2: memref<2xi32, #tpu.memory_space<smem>>, %arg3: memref<2xi32, #tpu.memory_space<smem>>) -> (i32, i32) {
    %c0_i32 = arith.constant 0 : i32
    %c0_i32_0 = arith.constant 0 : i32
    %c0_i32_1 = arith.constant 0 : i32
    return %c0_i32, %c0_i32_0 : i32, i32
  }
  func.func @transform_3(%arg0: i32, %arg1: i32, %arg2: memref<2xi32, #tpu.memory_space<smem>>, %arg3: memref<2xi32, #tpu.memory_space<smem>>) -> (i32, i32) {
    %c0_i32 = arith.constant 0 : i32
    %c0_i32_0 = arith.constant 0 : i32
    return %arg0, %c0_i32 : i32, i32
  }
}

</mosaic_0001>

<llo_original>
// kernel: tpu_custom_call.1
$region0: #{tpu_custom_call.1}
  #allocation0 [shape = 'u32[]', space=smem, size = 0x4, offset = 0x4, fixed_abs, tag = 'smem constant byte address 0x4 - core index']
  #allocation1 [shape = 'u32[144,128]{1,0:T(1,128)}', space=vmem, size = 0x12000, scoped, tag = 'internal scratch']
  #allocation2 [shape = 's32[1]{0}', space=sflag, size = 0x4, scoped, tag = 'scoped memory for tpu_custom_call.1']
  #allocation3 [shape = 'u8[512]{0}', space=smem, size = 0x200, scoped, tag = 'prefetched SMEM operand 0']
  #allocation4 [shape = 'u8[512]{0}', space=smem, size = 0x200, scoped, tag = 'prefetched SMEM operand 1']
  %s0 = inlined_call_operand.hbm [shape: s32[2], index: 0, kind: input, shape index: {}]
  %s1 = inlined_call_operand.vmem [shape: s32[2], index: 1, kind: input, shape index: {}]
  %s2 = inlined_call_operand.hbm [shape: f32[256,256], index: 2, kind: input, shape index: {}]
  %s3 = inlined_call_operand.hbm [shape: f32[256,128], index: 3, kind: input, shape index: {}]
  %s4 = inlined_call_operand.vmem [shape: f32[1,128], index: 4, kind: input, shape index: {}]
  %s5 = inlined_call_operand.hbm [shape: f32[256,128], index: 5, kind: output, shape index: {}]
  %s6 = sld [smem:[#allocation0]]
  $region61: #{tpu_custom_call.1} parent=0
    _
  %s8 = ssub.s32 1, %s6
  %s9 = scalar_select 0, %s8, %s6
  %11 = dma.hbm_to_smem %s0, 16, [#allocation3], [#allocation2]
  %s12 = sshll.u32 %s1, 4
  %s13 = int_to_ptr.vmem [resolvable:$true] %s12
  %15 = dma.vmem_to_smem %s13, 16, [#allocation4], [#allocation2]
  %16 = dma.done [#allocation2], 32
  %17 = sfence
  $region1: #{tpu_custom_call.1} parent=0
    #allocation5 [shape = 'u8[262144]{0}', space=vmem, size = 0x40000, scoped, tag = 'input window, operand 2']
    #allocation6 [shape = 's32[2]{0}', space=sflag, size = 0x8, scoped, tag = 'scoped memory for tpu_custom_call.1']
    #allocation7 [shape = 's32[2]{0}', space=sflag, size = 0x8, scoped, tag = 'scoped memory for tpu_custom_call.1']
    #allocation8 [shape = 'u8[131072]{0}', space=vmem, size = 0x20000, scoped, tag = 'input window, operand 3, single buffered']
    #allocation9 [shape = 's32[1]{0}', space=sflag, size = 0x4, scoped, tag = 'scoped memory for tpu_custom_call.1']
    #allocation10 [shape = 'u8[131072]{0}', space=vmem, size = 0x20000, scoped, tag = 'output window, operand 0']
    %18 = vsyncpa [#allocation6], 0
    %s19 = scalar_lea.sflag [#allocation6], 1
    %20 = vsyncpa %s19, 0
    %21 = vsyncpa [#allocation9], 0
    %22 = vsyncpa [#allocation7], 0
    %s23 = scalar_lea.sflag [#allocation7], 1
    %24 = vsyncpa %s23, 0
    loop: start=0, step=1, limit=4
    $region2: #{tpu_custom_call.1} parent=1 // loop_pre_header
      _
    $region3: #{tpu_custom_call.1} parent=1 // loop_header
      %s26 = sphi 0, %s30
      %p27 = scmp.ge.s32.totalorder %s26, 4
      %s33 = sphi 0, %s45
      %s34 = sphi 0, %s41
      %s35 = sphi 0, %s33
      %s36 = sphi 0, %s34
      %s37 = sphi 0, %s35
      %s38 = sphi 0, %s36
      %s66 = sphi 0, %s68
      %s69 = sphi 0, %s66
      %s70 = sphi 0, %s69
      %s86 = sphi 0, %s70
      %s90 = sphi 0, %s90
      %s92 = sphi 0, %s90
      %s93 = sphi 0, %s92
      %s107 = sphi 0, %s93
      %s111 = sphi 0, %s111
      %s113 = sphi 0, %s111
      %s114 = sphi 0, %s113
      %s128 = sphi 0, %s114
      %s134 = sphi 0, %s136
      %s137 = sphi 0, %s134
      %s138 = sphi 0, %s137
      %s154 = sphi 0, %s138
    $region4: #{tpu_custom_call.1} parent=1 // loop_header_branch
      %29 = sbr.rel (%p27) target = $region8
    $region5: #{tpu_custom_call.1} parent=1 // loop_body
      %s31 = ssub.s32 %s26, 1
      %s32 = ssub.s32 %s26, 2
      %s39 = sadd.s32 1, %s34
      %p40 = scmp.ge.s32.totalorder %s39, 1
      %s41 = scalar_select %p40, 0, %s39
      %s42 = sadd.s32 1, %s33
      %s43 = scalar_select %p40, %s42, %s33
      %p44 = scmp.ge.s32.totalorder %s43, 2
      %s45 = scalar_select %p44, 0, %s43
      %s46 = sld [smem:[#allocation4 + %s33]]
      %s47 = ssub.s32 %s46, 1
      %p48 = scmp.gt.s32.totalorder %s47, 0
      %s49 = scalar_select %p48, %s47, 0
      %p50 = scmp.lt.s32.totalorder %s34, %s49
      %s51 = scalar_select %p50, %s34, %s49
      %s52 = sadd.s32 %s33, %s51
      %s53 = sld [smem:[#allocation3 + %s52]]
      %s54 = sld [smem:[#allocation4 + %s45]]
      %s55 = ssub.s32 %s54, 1
      %p56 = scmp.gt.s32.totalorder %s55, 0
      %s57 = scalar_select %p56, %s55, 0
      %p58 = scmp.lt.s32.totalorder %s41, %s57
      %s59 = scalar_select %p58, %s41, %s57
      %s60 = sadd.s32 %s45, %s59
      %s61 = sld [smem:[#allocation3 + %s60]]
      %s62 = ssub.s32 %s33, %s45
      %s63 = ssub.s32 %s53, %s61
      %s64 = sor.u32 %s62, %s63
      %p65 = scmp.eq.s32.totalorder %s64, 0
      %s67 = sadd.s32 %s66, 1
      %s68 = scalar_select %p65, %s66, %s67
      %p71 = pneg %p65
      %p72 = scmp.eq.s32.totalorder %s26, 1
      %p73 = por %p71, %p72
      %p74 = scmp.ne.s32.totalorder %s66, %s69
      %p75 = scmp.eq.s32.totalorder %s26, 0
      %p76 = por %p74, %p75
      %p77 = scmp.ne.s32.totalorder %s66, %s69
      %p78 = scmp.eq.s32.totalorder %s31, 1
      %p79 = por %p77, %p78
      %p80 = scmp.ne.s32.totalorder %s69, %s70
      %p81 = scmp.eq.s32.totalorder %s31, 0
      %p82 = por %p80, %p81
      %p83 = scmp.ne.s32.totalorder %s69, %s70
      %p84 = scmp.eq.s32.totalorder %s32, 1
      %p85 = por %p83, %p84
      %p87 = scmp.ne.s32.totalorder %s70, %s86
      %p88 = scmp.eq.s32.totalorder %s32, 0
      %p89 = por %p87, %p88
      %s91 = sadd.s32 %s90, 1
      %p94 = scmp.eq.s32.totalorder %s26, 1
      %p95 = scmp.ne.s32.totalorder %s90, %s92
      %p96 = scmp.eq.s32.totalorder %s26, 0
      %p97 = por %p95, %p96
      %p98 = scmp.ne.s32.totalorder %s90, %s92
      %p99 = scmp.eq.s32.totalorder %s31, 1
      %p100 = por %p98, %p99
      %p101 = scmp.ne.s32.totalorder %s92, %s93
      %p102 = scmp.eq.s32.totalorder %s31, 0
      %p103 = por %p101, %p102
      %p104 = scmp.ne.s32.totalorder %s92, %s93
      %p105 = scmp.eq.s32.totalorder %s32, 1
      %p106 = por %p104, %p105
      %p108 = scmp.ne.s32.totalorder %s93, %s107
      %p109 = scmp.eq.s32.totalorder %s32, 0
      %p110 = por %p108, %p109
      %s112 = sadd.s32 %s111, 1
      %p115 = scmp.eq.s32.totalorder %s26, 1
      %p116 = scmp.ne.s32.totalorder %s111, %s113
      %p117 = scmp.eq.s32.totalorder %s26, 0
      %p118 = por %p116, %p117
      %p119 = scmp.ne.s32.totalorder %s111, %s113
      %p120 = scmp.eq.s32.totalorder %s31, 1
      %p121 = por %p119, %p120
      %p122 = scmp.ne.s32.totalorder %s113, %s114
      %p123 = scmp.eq.s32.totalorder %s31, 0
      %p124 = por %p122, %p123
      %p125 = scmp.ne.s32.totalorder %s113, %s114
      %p126 = scmp.eq.s32.totalorder %s32, 1
      %p127 = por %p125, %p126
      %p129 = scmp.ne.s32.totalorder %s114, %s128
      %p130 = scmp.eq.s32.totalorder %s32, 0
      %p131 = por %p129, %p130
      %s132 = ssub.s32 %s33, %s45
      %p133 = scmp.eq.s32.totalorder %s132, 0
      %s135 = sadd.s32 %s134, 1
      %s136 = scalar_select %p133, %s134, %s135
      %p139 = pneg %p133
      %p140 = scmp.eq.s32.totalorder %s26, 1
      %p141 = por %p139, %p140
      %p142 = scmp.ne.s32.totalorder %s134, %s137
      %p143 = scmp.eq.s32.totalorder %s26, 0
      %p144 = por %p142, %p143
      %p145 = scmp.ne.s32.totalorder %s134, %s137
      %p146 = scmp.eq.s32.totalorder %s31, 1
      %p147 = por %p145, %p146
      %p148 = scmp.ne.s32.totalorder %s137, %s138
      %p149 = scmp.eq.s32.totalorder %s31, 0
      %p150 = por %p148, %p149
      %p151 = scmp.ne.s32.totalorder %s137, %s138
      %p152 = scmp.eq.s32.totalorder %s32, 1
      %p153 = por %p151, %p152
      %p155 = scmp.ne.s32.totalorder %s138, %s154
      %p156 = scmp.eq.s32.totalorder %s32, 0
      %p157 = por %p155, %p156
      %p158 = scmp.le.s32.totalorder 1, %s26
      %p159 = scmp.lt.s32.totalorder %s26, 3
      %p160 = pnand %p158, %p159
      %p161 = pneg %p160
      // Predicated region
      $region9: #{tpu_custom_call.1} parent=5 // pred_check
        _
      $region10: #{tpu_custom_call.1} parent=5 // pred_check_branch
        %163 = sbr.rel (%p160) target = $region12
      $region11: #{tpu_custom_call.1} parent=5 // pred_region
        %s164 = ssub.s32 %s26, 1
        // Predicated region
        $region13: #{tpu_custom_call.1} parent=11 // pred_check
          %p165 = pneg %p103
        $region14: #{tpu_custom_call.1} parent=11 // pred_check_branch
          %167 = sbr.rel (%p165) target = $region16
        $region15: #{tpu_custom_call.1} parent=11 // pred_region
          %s169 = ssub.s32 4096, 4096
          %170 = vsyncadd [#allocation9], %s169
          %s171 = sshll.u32 [#allocation8], 4
          %s172 = int_to_ptr.vmem [resolvable:$true] %s171
          %177 = dma.hbm_to_vmem [thread:$0]  %s3, 4096, %s172, [#allocation9], 128, 128, 8
        $region16: #{tpu_custom_call.1} parent=11 // pred_fallthru
          _
        // Predicated region
        $region17: #{tpu_custom_call.1} parent=11 // pred_check
          %p178 = pneg %p124
        $region18: #{tpu_custom_call.1} parent=11 // pred_check_branch
          %180 = sbr.rel (%p178) target = $region20
        $region19: #{tpu_custom_call.1} parent=11 // pred_region
          _
        $region20: #{tpu_custom_call.1} parent=11 // pred_fallthru
          _
      $region12: #{tpu_custom_call.1} parent=5 // pred_fallthru
        _
      %p181 = scmp.lt.s32.totalorder %s26, 2
      // Predicated region
      $region21: #{tpu_custom_call.1} parent=5 // pred_check
        %p182 = pneg %p181
      $region22: #{tpu_custom_call.1} parent=5 // pred_check_branch
        %184 = sbr.rel (%p182) target = $region24
      $region23: #{tpu_custom_call.1} parent=5 // pred_region
        // Predicated region
        $region25: #{tpu_custom_call.1} parent=23 // pred_check
          %p185 = pneg %p76
        $region26: #{tpu_custom_call.1} parent=23 // pred_check_branch
          %187 = sbr.rel (%p185) target = $region28
        $region27: #{tpu_custom_call.1} parent=23 // pred_region
          %s188 = sand.u32 %s66, 1
          %s189 = scalar_lea.sflag [#allocation6], %s188
          %s190 = sand.u32 %s66, 1
          %s191 = smul.addr %s190, 256
          %s192 = scalar_lea.vmem [#allocation5], %s191
          %s193 = sld [smem:[#allocation4 + %s33]]
          %s194 = ssub.s32 %s193, 1
          %p195 = scmp.gt.s32.totalorder %s194, 0
          %s196 = scalar_select %p195, %s194, 0
          %p197 = scmp.lt.s32.totalorder %s34, %s196
          %s198 = scalar_select %p197, %s34, %s196
          %s199 = sadd.s32 %s33, %s198
          %s200 = sld [smem:[#allocation3 + %s199]]
          %s201 = smul.u32 16, %s33
          %s202 = smul.u32 2, %s200
          %s204 = ssub.s32 4096, 4096
          %205 = vsyncadd %s189, %s204
          %s206 = smul.addr %s201, 2
          %s207 = sadd.s32 %s202, %s206
          %s208 = smul.addr %s207, 128
          %s209 = scalar_lea.hbm %s2, %s208
          %s210 = sshll.u32 %s192, 4
          %s211 = int_to_ptr.vmem [resolvable:$true] %s210
          %216 = dma.hbm_to_vmem [thread:$0]  %s209, 4096, %s211, %s189, 256, 256, 16
        $region28: #{tpu_custom_call.1} parent=23 // pred_fallthru
          _
      $region24: #{tpu_custom_call.1} parent=5 // pred_fallthru
        _
      %p217 = scmp.le.s32.totalorder 1, %s26
      %p218 = scmp.lt.s32.totalorder %s26, 3
      %p219 = pnand %p217, %p218
      %p220 = pneg %p219
      // Predicated region
      $region29: #{tpu_custom_call.1} parent=5 // pred_check
        _
      $region30: #{tpu_custom_call.1} parent=5 // pred_check_branch
        %222 = sbr.rel (%p219) target = $region32
      $region31: #{tpu_custom_call.1} parent=5 // pred_region
        %s223 = ssub.s32 %s26, 1
        %s224 = sand.u32 %s69, 1
        %s225 = scalar_lea.sflag [#allocation6], %s224
        %s226 = sand.u32 %s69, 1
        %s227 = smul.addr %s226, 256
        %s228 = scalar_lea.vmem [#allocation5], %s227
        // Predicated region
        $region33: #{tpu_custom_call.1} parent=31 // pred_check
          %p229 = pneg %p82
        $region34: #{tpu_custom_call.1} parent=31 // pred_check_branch
          %231 = sbr.rel (%p229) target = $region36
        $region35: #{tpu_custom_call.1} parent=31 // pred_region
          %232 = dma.done %s225, 4096
        $region36: #{tpu_custom_call.1} parent=31 // pred_fallthru
          _
        // Predicated region
        $region37: #{tpu_custom_call.1} parent=31 // pred_check
          %p233 = pneg %p103
        $region38: #{tpu_custom_call.1} parent=31 // pred_check_branch
          %235 = sbr.rel (%p233) target = $region40
        $region39: #{tpu_custom_call.1} parent=31 // pred_region
          %236 = dma.done [#allocation9], 4096
        $region40: #{tpu_custom_call.1} parent=31 // pred_fallthru
          _
        %s237 = sand.u32 %s69, 1
        %s238 = scalar_lea.sflag [#allocation6], %s237
        %s239 = sand.u32 %s69, 1
        %s240 = smul.addr %s239, 256
        %s241 = scalar_lea.vmem [#allocation5], %s240
        %p242 = pneg %p82
        %p243 = pneg %p79
        %p244 = pneg %p103
        %p245 = pneg %p100
        %p246 = pneg %p124
        %p247 = pneg %p121
        %p248 = pneg %p150
        %p249 = pneg %p147
        %s250 = sand.u32 %s137, 1
        %s251 = scalar_lea.sflag [#allocation7], %s250
        %s252 = sand.u32 %s137, 1
        %s253 = smul.addr %s252, 128
        %s254 = scalar_lea.vmem [#allocation10], %s253
        %s255 = sld [smem:[#allocation4 + %s35]]
        %s256 = ssub.s32 %s255, 1
        %p257 = scmp.gt.s32.totalorder %s256, 0
        %s258 = scalar_select %p257, %s256, 0
        %p259 = scmp.lt.s32.totalorder %s36, %s258
        %s260 = scalar_select %p259, %s36, %s258
        %s261 = sadd.s32 %s35, %s260
        %s262 = sld [smem:[#allocation3 + %s261]]
        %s263 = smul.u32 16, %s35
        %s264 = smul.u32 2, %s262
        %s265 = smul.u32 16, %s35
        %p266 = scmp.eq.s32.totalorder %s36, 0
        // Predicated region
        $region41: #{tpu_custom_call.1} parent=31 // pred_check
          %p267 = pneg %p266
        $region42: #{tpu_custom_call.1} parent=31 // pred_check_branch
          %269 = sbr.rel (%p267) target = $region44
        $region43: #{tpu_custom_call.1} parent=31 // pred_region
          %v270 = vld [vmem:[%s4] sm:$0x1]
          %v272 = vlaneseq
          %v273 = vshrl.u32 %v272, 7
          %v274 = vsub.s32 0, %v273
          %v275 = vrot.slane %v270, %v274
          %277 = vst [vmem:[%s254] sm:$0xff] %v275
          %278 = vst [vmem:[%s254 + $0x8] sm:$0xff] %v275
          %279 = vst [vmem:[%s254 + $0x10] sm:$0xff] %v275
          %280 = vst [vmem:[%s254 + $0x18] sm:$0xff] %v275
          %281 = vst [vmem:[%s254 + $0x20] sm:$0xff] %v275
          %282 = vst [vmem:[%s254 + $0x28] sm:$0xff] %v275
          %283 = vst [vmem:[%s254 + $0x30] sm:$0xff] %v275
          %284 = vst [vmem:[%s254 + $0x38] sm:$0xff] %v275
          %285 = vst [vmem:[%s254 + $0x40] sm:$0xff] %v275
          %286 = vst [vmem:[%s254 + $0x48] sm:$0xff] %v275
          %287 = vst [vmem:[%s254 + $0x50] sm:$0xff] %v275
          %288 = vst [vmem:[%s254 + $0x58] sm:$0xff] %v275
          %289 = vst [vmem:[%s254 + $0x60] sm:$0xff] %v275
          %290 = vst [vmem:[%s254 + $0x68] sm:$0xff] %v275
          %291 = vst [vmem:[%s254 + $0x70] sm:$0xff] %v275
          %292 = vst [vmem:[%s254 + $0x78] sm:$0xff] %v275
        $region44: #{tpu_custom_call.1} parent=31 // pred_fallthru
          _
        %s293 = sld [smem:[#allocation4 + %s35]]
        %p294 = scmp.lt.s32.totalorder %s36, %s293
        // Predicated region
        $region45: #{tpu_custom_call.1} parent=31 // pred_check
          %p295 = pneg %p294
        $region46: #{tpu_custom_call.1} parent=31 // pred_check_branch
          %297 = sbr.rel (%p295) target = $region48
        $region47: #{tpu_custom_call.1} parent=31 // pred_region
          %s298 = sadd.s32 %s35, %s36
          %s299 = sld [smem:[#allocation3 + %s298]]
          %s300 = smul.u32 %s299, 256
          %s301 = scalar_lea.vmem [#allocation8], %s300
          %v302 = vld [vmem:[%s301] sm:$0xff]
          %v303 = vld [vmem:[%s301 + $0x8] sm:$0xff]
          %v304 = vld [vmem:[%s301 + $0x10] sm:$0xff]
          %v305 = vld [vmem:[%s301 + $0x18] sm:$0xff]
          %v306 = vld [vmem:[%s301 + $0x20] sm:$0xff]
          %v307 = vld [vmem:[%s301 + $0x28] sm:$0xff]
          %v308 = vld [vmem:[%s301 + $0x30] sm:$0xff]
          %v309 = vld [vmem:[%s301 + $0x38] sm:$0xff]
          %v310 = vld [vmem:[%s301 + $0x40] sm:$0xff]
          %v311 = vld [vmem:[%s301 + $0x48] sm:$0xff]
          %v312 = vld [vmem:[%s301 + $0x50] sm:$0xff]
          %v313 = vld [vmem:[%s301 + $0x58] sm:$0xff]
          %v314 = vld [vmem:[%s301 + $0x60] sm:$0xff]
          %v315 = vld [vmem:[%s301 + $0x68] sm:$0xff]
          %v316 = vld [vmem:[%s301 + $0x70] sm:$0xff]
          %v317 = vld [vmem:[%s301 + $0x78] sm:$0xff]
          %v318 = vld [vmem:[%s301 + $0x80] sm:$0xff]
          %v319 = vld [vmem:[%s301 + $0x88] sm:$0xff]
          %v320 = vld [vmem:[%s301 + $0x90] sm:$0xff]
          %v321 = vld [vmem:[%s301 + $0x98] sm:$0xff]
          %v322 = vld [vmem:[%s301 + $0xa0] sm:$0xff]
          %v323 = vld [vmem:[%s301 + $0xa8] sm:$0xff]
          %v324 = vld [vmem:[%s301 + $0xb0] sm:$0xff]
          %v325 = vld [vmem:[%s301 + $0xb8] sm:$0xff]
          %v326 = vld [vmem:[%s301 + $0xc0] sm:$0xff]
          %v327 = vld [vmem:[%s301 + $0xc8] sm:$0xff]
          %v328 = vld [vmem:[%s301 + $0xd0] sm:$0xff]
          %v329 = vld [vmem:[%s301 + $0xd8] sm:$0xff]
          %v330 = vld [vmem:[%s301 + $0xe0] sm:$0xff]
          %v331 = vld [vmem:[%s301 + $0xe8] sm:$0xff]
          %v332 = vld [vmem:[%s301 + $0xf0] sm:$0xff]
          %v333 = vld [vmem:[%s301 + $0xf8] sm:$0xff]
          %v334 = vld [vmem:[%s254] sm:$0xff]
          %v335 = vld [vmem:[%s254 + $0x8] sm:$0xff]
          %v336 = vld [vmem:[%s254 + $0x10] sm:$0xff]
          %v337 = vld [vmem:[%s254 + $0x18] sm:$0xff]
          %v338 = vld [vmem:[%s254 + $0x20] sm:$0xff]
          %v339 = vld [vmem:[%s254 + $0x28] sm:$0xff]
          %v340 = vld [vmem:[%s254 + $0x30] sm:$0xff]
          %v341 = vld [vmem:[%s254 + $0x38] sm:$0xff]
          %v342 = vld [vmem:[%s254 + $0x40] sm:$0xff]
          %v343 = vld [vmem:[%s254 + $0x48] sm:$0xff]
          %v344 = vld [vmem:[%s254 + $0x50] sm:$0xff]
          %v345 = vld [vmem:[%s254 + $0x58] sm:$0xff]
          %v346 = vld [vmem:[%s254 + $0x60] sm:$0xff]
          %v347 = vld [vmem:[%s254 + $0x68] sm:$0xff]
          %v348 = vld [vmem:[%s254 + $0x70] sm:$0xff]
          %v349 = vld [vmem:[%s254 + $0x78] sm:$0xff]
          %v350 = vld [vmem:[%s228] sm:$0xff]
          %v351 = vld [vmem:[%s228 + $0x8] sm:$0xff]
          %v352 = vld [vmem:[%s228 + $0x10] sm:$0xff]
          %v353 = vld [vmem:[%s228 + $0x18] sm:$0xff]
          %v354 = vld [vmem:[%s228 + $0x20] sm:$0xff]
          %v355 = vld [vmem:[%s228 + $0x28] sm:$0xff]
          %v356 = vld [vmem:[%s228 + $0x30] sm:$0xff]
          %v357 = vld [vmem:[%s228 + $0x38] sm:$0xff]
          %v358 = vld [vmem:[%s228 + $0x40] sm:$0xff]
          %v359 = vld [vmem:[%s228 + $0x48] sm:$0xff]
          %v360 = vld [vmem:[%s228 + $0x50] sm:$0xff]
          %v361 = vld [vmem:[%s228 + $0x58] sm:$0xff]
          %v362 = vld [vmem:[%s228 + $0x60] sm:$0xff]
          %v363 = vld [vmem:[%s228 + $0x68] sm:$0xff]
          %v364 = vld [vmem:[%s228 + $0x70] sm:$0xff]
          %v365 = vld [vmem:[%s228 + $0x78] sm:$0xff]
          %v366 = vld [vmem:[%s228 + $0x80] sm:$0xff]
          %v367 = vld [vmem:[%s228 + $0x88] sm:$0xff]
          %v368 = vld [vmem:[%s228 + $0x90] sm:$0xff]
          %v369 = vld [vmem:[%s228 + $0x98] sm:$0xff]
          %v370 = vld [vmem:[%s228 + $0xa0] sm:$0xff]
          %v371 = vld [vmem:[%s228 + $0xa8] sm:$0xff]
          %v372 = vld [vmem:[%s228 + $0xb0] sm:$0xff]
          %v373 = vld [vmem:[%s228 + $0xb8] sm:$0xff]
          %v374 = vld [vmem:[%s228 + $0xc0] sm:$0xff]
          %v375 = vld [vmem:[%s228 + $0xc8] sm:$0xff]
          %v376 = vld [vmem:[%s228 + $0xd0] sm:$0xff]
          %v377 = vld [vmem:[%s228 + $0xd8] sm:$0xff]
          %v378 = vld [vmem:[%s228 + $0xe0] sm:$0xff]
          %v379 = vld [vmem:[%s228 + $0xe8] sm:$0xff]
          %v380 = vld [vmem:[%s228 + $0xf0] sm:$0xff]
          %v381 = vld [vmem:[%s228 + $0xf8] sm:$0xff]
          %382 = vmatprep.subr.mxu0 0.0
          %383 = vmatpush1.msra.mxu0 %v302
          %384 = vmatprep.subr.mxu0 0.0
          %385 = vmatpush1.msra.mxu0 %v303
          %386 = vmatprep.subr.mxu0 0.0
          %387 = vmatpush1.msra.mxu0 %v304
          %388 = vmatprep.subr.mxu0 0.0
          %389 = vmatpush1.msra.mxu0 %v305
          %390 = vmatprep.subr.mxu0 0.0
          %391 = vmatpush1.msra.mxu0 %v306
          %392 = vmatprep.subr.mxu0 0.0
          %393 = vmatpush1.msra.mxu0 %v307
          %394 = vmatprep.subr.mxu0 0.0
          %395 = vmatpush1.msra.mxu0 %v308
          %396 = vmatprep.subr.mxu0 0.0
          %397 = vmatpush1.msra.mxu0 %v309
          %398 = vmatprep.subr.mxu0 0.0
          %399 = vmatpush1.msra.mxu0 %v310
          %400 = vmatprep.subr.mxu0 0.0
          %401 = vmatpush1.msra.mxu0 %v311
          %402 = vmatprep.subr.mxu0 0.0
          %403 = vmatpush1.msra.mxu0 %v312
          %404 = vmatprep.subr.mxu0 0.0
          %405 = vmatpush1.msra.mxu0 %v313
          %406 = vmatprep.subr.mxu0 0.0
          %407 = vmatpush1.msra.mxu0 %v314
          %408 = vmatprep.subr.mxu0 0.0
          %409 = vmatpush1.msra.mxu0 %v315
          %410 = vmatprep.subr.mxu0 0.0
          %411 = vmatpush1.msra.mxu0 %v316
          %412 = vmatprep.subr.mxu0 0.0
          %413 = vmatpush1.msra.mxu0 %v317
          %414 = vmatprep.subr.mxu0 0.0
          %415 = vmatpush1.msra.mxu0 %v318
          %416 = vmatprep.subr.mxu0 0.0
          %417 = vmatpush1.msra.mxu0 %v319
          %418 = vmatprep.subr.mxu0 0.0
          %419 = vmatpush1.msra.mxu0 %v320
          %420 = vmatprep.subr.mxu0 0.0
          %421 = vmatpush1.msra.mxu0 %v321
          %422 = vmatprep.subr.mxu0 0.0
          %423 = vmatpush1.msra.mxu0 %v322
          %424 = vmatprep.subr.mxu0 0.0
          %425 = vmatpush1.msra.mxu0 %v323
          %426 = vmatprep.subr.mxu0 0.0
          %427 = vmatpush1.msra.mxu0 %v324
          %428 = vmatprep.subr.mxu0 0.0
          %429 = vmatpush1.msra.mxu0 %v325
          %430 = vmatprep.subr.mxu0 0.0
          %431 = vmatpush1.msra.mxu0 %v326
          %432 = vmatprep.subr.mxu0 0.0
          %433 = vmatpush1.msra.mxu0 %v327
          %434 = vmatprep.subr.mxu0 0.0
          %435 = vmatpush1.msra.mxu0 %v328
          %436 = vmatprep.subr.mxu0 0.0
          %437 = vmatpush1.msra.mxu0 %v329
          %438 = vmatprep.subr.mxu0 0.0
          %439 = vmatpush1.msra.mxu0 %v330
          %440 = vmatprep.subr.mxu0 0.0
          %441 = vmatpush1.msra.mxu0 %v331
          %442 = vmatprep.subr.mxu0 0.0
          %443 = vmatpush1.msra.mxu0 %v332
          %444 = vmatprep.subr.mxu0 0.0
          %445 = vmatpush1.msra.mxu0 %v333
          %446 = vmatprep.mubr.f32.mxu0 %v351
          %447 = vmatmul.mubr.f32.gmra.mrb[0].mxu0 %v350
          %v448 = vpop.f32.mrb[0].mxu0
          %v449 = vadd.f32 0.0, %v448
          %v450 = vpop.f32.mrb[0].mxu0
          %451 = vmatprep.mubr.f32.mxu0 %v353
          %452 = vmatmul.mubr.f32.gmra.mrb[0].mxu0 %v352
          %v453 = vpop.f32.mrb[0].mxu0
          %v454 = vadd.f32 0.0, %v453
          %v455 = vpop.f32.mrb[0].mxu0
          %456 = vmatprep.mubr.f32.mxu0 %v355
          %457 = vmatmul.mubr.f32.gmra.mrb[0].mxu0 %v354
          %v458 = vpop.f32.mrb[0].mxu0
          %v459 = vadd.f32 0.0, %v458
          %v460 = vpop.f32.mrb[0].mxu0
          %461 = vmatprep.mubr.f32.mxu0 %v357
          %462 = vmatmul.mubr.f32.gmra.mrb[0].mxu0 %v356
          %v463 = vpop.f32.mrb[0].mxu0
          %v464 = vadd.f32 0.0, %v463
          %v465 = vpop.f32.mrb[0].mxu0
          %466 = vmatprep.mubr.f32.mxu0 %v359
          %467 = vmatmul.mubr.f32.gmra.mrb[0].mxu0 %v358
          %v468 = vpop.f32.mrb[0].mxu0
          %v469 = vadd.f32 0.0, %v468
          %v470 = vpop.f32.mrb[0].mxu0
          %471 = vmatprep.mubr.f32.mxu0 %v361
          %472 = vmatmul.mubr.f32.gmra.mrb[0].mxu0 %v360
          %v473 = vpop.f32.mrb[0].mxu0
          %v474 = vadd.f32 0.0, %v473
          %v475 = vpop.f32.mrb[0].mxu0
          %476 = vmatprep.mubr.f32.mxu0 %v363
          %477 = vmatmul.mubr.f32.gmra.mrb[0].mxu0 %v362
          %v478 = vpop.f32.mrb[0].mxu0
          %v479 = vadd.f32 0.0, %v478
          %v480 = vpop.f32.mrb[0].mxu0
          %481 = vmatprep.mubr.f32.mxu0 %v365
          %482 = vmatmul.mubr.f32.gmra.mrb[0].mxu0 %v364
          %v483 = vpop.f32.mrb[0].mxu0
          %v484 = vadd.f32 0.0, %v483
          %v485 = vpop.f32.mrb[0].mxu0
          %486 = vmatprep.mubr.f32.mxu0 %v367
          %487 = vmatmul.mubr.f32.gmra.mrb[0].mxu0 %v366
          %v488 = vpop.f32.mrb[0].mxu0
          %v489 = vadd.f32 0.0, %v488
          %v490 = vpop.f32.mrb[0].mxu0
          %491 = vmatprep.mubr.f32.mxu0 %v369
          %492 = vmatmul.mubr.f32.gmra.mrb[0].mxu0 %v368
          %v493 = vpop.f32.mrb[0].mxu0
          %v494 = vadd.f32 0.0, %v493
          %v495 = vpop.f32.mrb[0].mxu0
          %496 = vmatprep.mubr.f32.mxu0 %v371
          %497 = vmatmul.mubr.f32.gmra.mrb[0].mxu0 %v370
          %v498 = vpop.f32.mrb[0].mxu0
          %v499 = vadd.f32 0.0, %v498
          %v500 = vpop.f32.mrb[0].mxu0
          %501 = vmatprep.mubr.f32.mxu0 %v373
          %502 = vmatmul.mubr.f32.gmra.mrb[0].mxu0 %v372
          %v503 = vpop.f32.mrb[0].mxu0
          %v504 = vadd.f32 0.0, %v503
          %v505 = vpop.f32.mrb[0].mxu0
          %506 = vmatprep.mubr.f32.mxu0 %v375
          %507 = vmatmul.mubr.f32.gmra.mrb[0].mxu0 %v374
          %v508 = vpop.f32.mrb[0].mxu0
          %v509 = vadd.f32 0.0, %v508
          %v510 = vpop.f32.mrb[0].mxu0
          %511 = vmatprep.mubr.f32.mxu0 %v377
          %512 = vmatmul.mubr.f32.gmra.mrb[0].mxu0 %v376
          %v513 = vpop.f32.mrb[0].mxu0
          %v514 = vadd.f32 0.0, %v513
          %v515 = vpop.f32.mrb[0].mxu0
          %516 = vmatprep.mubr.f32.mxu0 %v379
          %517 = vmatmul.mubr.f32.gmra.mrb[0].mxu0 %v378
          %v518 = vpop.f32.mrb[0].mxu0
          %v519 = vadd.f32 0.0, %v518
          %v520 = vpop.f32.mrb[0].mxu0
          %521 = vmatprep.mubr.f32.mxu0 %v381
          %522 = vmatmul.mubr.f32.gmra.mrb[0].mxu0 %v380
          %v523 = vpop.f32.mrb[0].mxu0
          %v524 = vadd.f32 0.0, %v523
          %v525 = vpop.f32.mrb[0].mxu0
          %526 = vdwg.mxu0
          %v527 = vadd.f32 %v334, %v449
          %v528 = vadd.f32 %v335, %v454
          %v529 = vadd.f32 %v336, %v459
          %v530 = vadd.f32 %v337, %v464
          %v531 = vadd.f32 %v338, %v469
          %v532 = vadd.f32 %v339, %v474
          %v533 = vadd.f32 %v340, %v479
          %v534 = vadd.f32 %v341, %v484
          %v535 = vadd.f32 %v342, %v489
          %v536 = vadd.f32 %v343, %v494
          %v537 = vadd.f32 %v344, %v499
          %v538 = vadd.f32 %v345, %v504
          %v539 = vadd.f32 %v346, %v509
          %v540 = vadd.f32 %v347, %v514
          %v541 = vadd.f32 %v348, %v519
          %v542 = vadd.f32 %v349, %v524
          %543 = vst [vmem:[%s254] sm:$0xff] %v527
          %544 = vst [vmem:[%s254 + $0x8] sm:$0xff] %v528
          %545 = vst [vmem:[%s254 + $0x10] sm:$0xff] %v529
          %546 = vst [vmem:[%s254 + $0x18] sm:$0xff] %v530
          %547 = vst [vmem:[%s254 + $0x20] sm:$0xff] %v531
          %548 = vst [vmem:[%s254 + $0x28] sm:$0xff] %v532
          %549 = vst [vmem:[%s254 + $0x30] sm:$0xff] %v533
          %550 = vst [vmem:[%s254 + $0x38] sm:$0xff] %v534
          %551 = vst [vmem:[%s254 + $0x40] sm:$0xff] %v535
          %552 = vst [vmem:[%s254 + $0x48] sm:$0xff] %v536
          %553 = vst [vmem:[%s254 + $0x50] sm:$0xff] %v537
          %554 = vst [vmem:[%s254 + $0x58] sm:$0xff] %v538
          %555 = vst [vmem:[%s254 + $0x60] sm:$0xff] %v539
          %556 = vst [vmem:[%s254 + $0x68] sm:$0xff] %v540
          %557 = vst [vmem:[%s254 + $0x70] sm:$0xff] %v541
          %558 = vst [vmem:[%s254 + $0x78] sm:$0xff] %v542
        $region48: #{tpu_custom_call.1} parent=31 // pred_fallthru
          _
        %s559 = sand.u32 %s137, 1
        %s560 = scalar_lea.sflag [#allocation7], %s559
        %s561 = sand.u32 %s137, 1
        %s562 = smul.addr %s561, 128
        %s563 = scalar_lea.vmem [#allocation10], %s562
        // Predicated region
        $region49: #{tpu_custom_call.1} parent=31 // pred_check
          %p564 = pneg %p147
        $region50: #{tpu_custom_call.1} parent=31 // pred_check_branch
          %566 = sbr.rel (%p564) target = $region52
        $region51: #{tpu_custom_call.1} parent=31 // pred_region
          %s567 = smul.u32 16, %s35
          %s569 = ssub.s32 2048, 2048
          %570 = vsyncadd %s560, %s569
          %s571 = smul.addr %s567, 128
          %s572 = scalar_lea.hbm %s5, %s571
          %s573 = sshll.u32 %s563, 4
          %s574 = int_to_ptr.vmem [resolvable:$true] %s573
          %579 = dma.vmem_to_hbm [thread:$0]  %s574, 2048, %s572, %s560, 128, 128, 8
        $region52: #{tpu_custom_call.1} parent=31 // pred_fallthru
          _
      $region32: #{tpu_custom_call.1} parent=5 // pred_fallthru
        _
      %p580 = scmp.le.s32.totalorder 2, %s26
      // Predicated region
      $region53: #{tpu_custom_call.1} parent=5 // pred_check
        %p581 = pneg %p580
      $region54: #{tpu_custom_call.1} parent=5 // pred_check_branch
        %583 = sbr.rel (%p581) target = $region56
      $region55: #{tpu_custom_call.1} parent=5 // pred_region
        %s584 = ssub.s32 %s26, 2
        // Predicated region
        $region57: #{tpu_custom_call.1} parent=55 // pred_check
          %p585 = pneg %p153
        $region58: #{tpu_custom_call.1} parent=55 // pred_check_branch
          %587 = sbr.rel (%p585) target = $region60
        $region59: #{tpu_custom_call.1} parent=55 // pred_region
          %s588 = sand.u32 %s138, 1
          %s589 = scalar_lea.sflag [#allocation7], %s588
          %s590 = sand.u32 %s138, 1
          %s591 = smul.addr %s590, 128
          %s592 = scalar_lea.vmem [#allocation10], %s591
          %593 = dma.done %s589, 2048
        $region60: #{tpu_custom_call.1} parent=55 // pred_fallthru
          _
      $region56: #{tpu_custom_call.1} parent=5 // pred_fallthru
        _
    $region6: #{tpu_custom_call.1} parent=1 // loop_footer
      %s30 = sadd.s32 1, %s26
    $region7: #{tpu_custom_call.1} parent=1 // loop_footer_branch
      %25 = sbr.rel target = $region3
    $region8: #{tpu_custom_call.1} parent=1 // loop_exit
      _
    %594 = vsyncpa [#allocation6], 1
    %s595 = scalar_lea.sflag [#allocation6], 1
    %596 = vsyncpa %s595, 1
    %597 = vsyncpa [#allocation9], 1
    %598 = vsyncpa [#allocation7], 1
    %s599 = scalar_lea.sflag [#allocation7], 1
    %600 = vsyncpa %s599, 1

</llo_original>
